<compile_context>
chip_gen: v7x
topology: tpu7x:2x2x1
jax: 0.10.0
libtpu: 0.0.40
codegen_flags: <defaults>
</compile_context>

<pallas_src>
import math

import jax
import jax.numpy as jnp
from jax.experimental import pallas as pl
from jax.experimental.pallas import tpu as pltpu

THRESHOLD = 1.0   # self.threshold
ALPHA = 2.0       # self.alpha
LAM = 0.5         # self.lam
LANE = 128


def _round_up(x: int, m: int) -> int:
    return ((x + m - 1) // m) * m


def _fpt_kernel(x_ref, u01_ref, o_ref):
    # x_ref / u01_ref / o_ref: (T, tile_rows, 128)
    T = x_ref.shape[0]
    x = x_ref[...].astype(jnp.float32)

    def lambda_matmul(rows):
        # Lambda[i, j] = lam**(i-j) for j <= i  =>  y[t] = lam*y[t-1] + rows[t]
        out = [rows[0]]
        for t in range(1, T):
            out.append(LAM * out[t - 1] + rows[t])
        return out

    def a_matmul(rows):
        # A = Lambda - I  =>  (A @ rows)[t] = (Lambda @ rows)[t] - rows[t]
        lo = lambda_matmul(rows)
        return [lo[t] - rows[t] for t in range(T)]

    def surrogate_sigmoid(u_t, scale):
        return jax.nn.sigmoid((u_t - THRESHOLD) * scale)

    xs = [x[t] for t in range(T)]

    # u = Lambda @ x ; C = u ; o = sigmoid((u - thr) * alpha)
    u = lambda_matmul(xs)
    C = u
    o = [surrogate_sigmoid(u_t, ALPHA) for u_t in u]

    # Two fixed-point iterations (max_iter = 2), alpha*3 then alpha*6.
    for scale in (ALPHA * 3.0, ALPHA * 6.0):
        ao = a_matmul(o)
        u = [(-THRESHOLD) * ao[t] + C[t] for t in range(T)]
        o = [surrogate_sigmoid(u[t], scale) for t in range(T)]

    # SurrogateSampling: bernoulli(o) via precomputed uniforms.
    u01 = u01_ref[...].astype(jnp.float32)
    for t in range(T):
        o_ref[t] = (u01[t] < o[t]).astype(o_ref.dtype)


def fpt_adaptive_alpha_forward(x_seq: jnp.ndarray, sample_key, *, tile_rows: int = 1024):
    """Forward pass of FPT_adaptive_alpha. Returns bernoulli spikes, f32 0/1."""
    T = x_seq.shape[0]
    lead_shape = x_seq.shape
    N = math.prod(lead_shape[1:])

    # --- choose a lane/sublane-dense tiling -------------------------------
    R = pl.cdiv(N, LANE)                       # rows of 128 lanes needed
    tile_rows = max(8, min(tile_rows, _round_up(R, 8)))
    tile_rows = _round_up(tile_rows, 8)

    # Cap per-step VMEM: 3 streams (x, u01, out) x double-buffered.
    vmem_budget = 24 * 1024 * 1024
    bytes_per_row = T * LANE * 4
    max_tile_rows = max(8, (vmem_budget // (6 * bytes_per_row)) // 8 * 8)
    tile_rows = min(tile_rows, max_tile_rows)

    R_pad = _round_up(R, tile_rows)
    N_pad = R_pad * LANE
    grid = (R_pad // tile_rows,)

    # --- prepare inputs (keep native dtype; cast happens in-kernel) -------
    x_flat = x_seq.reshape(T, N)
    if N_pad != N:
        x_flat = jnp.pad(x_flat, ((0, 0), (0, N_pad - N)))
    x3 = x_flat.reshape(T, R_pad, LANE)

    u01 = jax.random.uniform(sample_key, (T, R_pad, LANE), dtype=jnp.float32)

    blk = (T, tile_rows, LANE)
    out = pl.pallas_call(
        _fpt_kernel,
        out_shape=jax.ShapeDtypeStruct((T, R_pad, LANE), jnp.float32),
        grid=grid,
        in_specs=[
            pl.BlockSpec(blk, lambda i: (0, i, 0)),   # x tile
            pl.BlockSpec(blk, lambda i: (0, i, 0)),   # uniform tile
        ],
        out_specs=pl.BlockSpec(blk, lambda i: (0, i, 0)),
        compiler_params=pltpu.CompilerParams(
            dimension_semantics=("parallel",),
            vmem_limit_bytes=32 * 1024 * 1024,
        ),
    )(x3, u01)

    out_flat = out.reshape(T, N_pad)[:, :N]
    return out_flat.reshape(lead_shape)


if __name__ == "__main__":
    # Small shapes consistent with the module: x_seq is (T, batch, C, H, W).
    T, B, C, H, W = 4, 2, 4, 16, 16
    key = jax.random.PRNGKey(0)
    x_key, s_key = jax.random.split(key)
    x_seq = jax.random.normal(x_key, (T, B, C, H, W), dtype=jnp.float32)

    o = fpt_adaptive_alpha_forward(x_seq, s_key, tile_rows=1024)
    o = jax.block_until_ready(o)

    assert o.shape == (T, B, C, H, W)
    assert o.dtype == jnp.float32
    # bernoulli output must be exactly 0/1
    assert bool(jnp.all((o == 0.0) | (o == 1.0)))
    print("KERNEL_OK")
</pallas_src>

<mosaic_0001>
module attributes {stable_mosaic.version = 11 : i64} {
  func.func @_fpt_kernel(%arg0: i32, %arg1: memref<4x16x128xf32, #tpu.memory_space<vmem>>, %arg2: memref<4x16x128xf32, #tpu.memory_space<vmem>>, %arg3: memref<4x16x128xf32, #tpu.memory_space<vmem>>) attributes {dimension_semantics = [#tpu.dimension_semantics<parallel>], iteration_bounds = array<i64: 1>, scalar_prefetch = 0 : i64, scratch_operands = 0 : i64, tpu.core_type = #tpu.core_type<tc>, window_params = [{transform_indices = @transform_0, window_bounds = array<i64: 4, 16, 128>}, {transform_indices = @transform_1, window_bounds = array<i64: 4, 16, 128>}, {transform_indices = @transform_2, window_bounds = array<i64: 4, 16, 128>}]} {
    %c0 = arith.constant 0 : index
    %c0_0 = arith.constant 0 : index
    %c0_1 = arith.constant 0 : index
    %0 = vector.load %arg1[%c0, %c0_0, %c0_1] : memref<4x16x128xf32, #tpu.memory_space<vmem>>, vector<4x16x128xf32>
    %1 = vector.extract_strided_slice %0 {offsets = [0, 0, 0], sizes = [1, 16, 128], strides = [1, 1, 1]} : vector<4x16x128xf32> to vector<1x16x128xf32>
    %2 = vector.shape_cast %1 : vector<1x16x128xf32> to vector<16x128xf32>
    %3 = vector.extract_strided_slice %0 {offsets = [1, 0, 0], sizes = [1, 16, 128], strides = [1, 1, 1]} : vector<4x16x128xf32> to vector<1x16x128xf32>
    %4 = vector.shape_cast %3 : vector<1x16x128xf32> to vector<16x128xf32>
    %5 = vector.extract_strided_slice %0 {offsets = [2, 0, 0], sizes = [1, 16, 128], strides = [1, 1, 1]} : vector<4x16x128xf32> to vector<1x16x128xf32>
    %6 = vector.shape_cast %5 : vector<1x16x128xf32> to vector<16x128xf32>
    %7 = vector.extract_strided_slice %0 {offsets = [3, 0, 0], sizes = [1, 16, 128], strides = [1, 1, 1]} : vector<4x16x128xf32> to vector<1x16x128xf32>
    %8 = vector.shape_cast %7 : vector<1x16x128xf32> to vector<16x128xf32>
    %cst = arith.constant 5.000000e-01 : f32
    %9 = vector.broadcast %cst : f32 to vector<16x128xf32>
    %10 = arith.mulf %9, %2 : vector<16x128xf32>
    %11 = arith.addf %10, %4 : vector<16x128xf32>
    %cst_2 = arith.constant 5.000000e-01 : f32
    %12 = vector.broadcast %cst_2 : f32 to vector<16x128xf32>
    %13 = arith.mulf %12, %11 : vector<16x128xf32>
    %14 = arith.addf %13, %6 : vector<16x128xf32>
    %cst_3 = arith.constant 5.000000e-01 : f32
    %15 = vector.broadcast %cst_3 : f32 to vector<16x128xf32>
    %16 = arith.mulf %15, %14 : vector<16x128xf32>
    %17 = arith.addf %16, %8 : vector<16x128xf32>
    %cst_4 = arith.constant 1.000000e+00 : f32
    %18 = vector.broadcast %cst_4 : f32 to vector<16x128xf32>
    %19 = arith.subf %2, %18 : vector<16x128xf32>
    %cst_5 = arith.constant 2.000000e+00 : f32
    %20 = vector.broadcast %cst_5 : f32 to vector<16x128xf32>
    %21 = arith.mulf %19, %20 : vector<16x128xf32>
    %22 = arith.negf %21 : vector<16x128xf32>
    %23 = math.exp %22 : vector<16x128xf32>
    %cst_6 = arith.constant 1.000000e+00 : f32
    %24 = vector.broadcast %cst_6 : f32 to vector<16x128xf32>
    %25 = arith.addf %24, %23 : vector<16x128xf32>
    %26 = arith.divf %24, %25 : vector<16x128xf32>
    %cst_7 = arith.constant 1.000000e+00 : f32
    %27 = vector.broadcast %cst_7 : f32 to vector<16x128xf32>
    %28 = arith.subf %11, %27 : vector<16x128xf32>
    %cst_8 = arith.constant 2.000000e+00 : f32
    %29 = vector.broadcast %cst_8 : f32 to vector<16x128xf32>
    %30 = arith.mulf %28, %29 : vector<16x128xf32>
    %31 = arith.negf %30 : vector<16x128xf32>
    %32 = math.exp %31 : vector<16x128xf32>
    %cst_9 = arith.constant 1.000000e+00 : f32
    %33 = vector.broadcast %cst_9 : f32 to vector<16x128xf32>
    %34 = arith.addf %33, %32 : vector<16x128xf32>
    %35 = arith.divf %33, %34 : vector<16x128xf32>
    %cst_10 = arith.constant 1.000000e+00 : f32
    %36 = vector.broadcast %cst_10 : f32 to vector<16x128xf32>
    %37 = arith.subf %14, %36 : vector<16x128xf32>
    %cst_11 = arith.constant 2.000000e+00 : f32
    %38 = vector.broadcast %cst_11 : f32 to vector<16x128xf32>
    %39 = arith.mulf %37, %38 : vector<16x128xf32>
    %40 = arith.negf %39 : vector<16x128xf32>
    %41 = math.exp %40 : vector<16x128xf32>
    %cst_12 = arith.constant 1.000000e+00 : f32
    %42 = vector.broadcast %cst_12 : f32 to vector<16x128xf32>
    %43 = arith.addf %42, %41 : vector<16x128xf32>
    %44 = arith.divf %42, %43 : vector<16x128xf32>
    %cst_13 = arith.constant 1.000000e+00 : f32
    %45 = vector.broadcast %cst_13 : f32 to vector<16x128xf32>
    %46 = arith.subf %17, %45 : vector<16x128xf32>
    %cst_14 = arith.constant 2.000000e+00 : f32
    %47 = vector.broadcast %cst_14 : f32 to vector<16x128xf32>
    %48 = arith.mulf %46, %47 : vector<16x128xf32>
    %49 = arith.negf %48 : vector<16x128xf32>
    %50 = math.exp %49 : vector<16x128xf32>
    %cst_15 = arith.constant 1.000000e+00 : f32
    %51 = vector.broadcast %cst_15 : f32 to vector<16x128xf32>
    %52 = arith.addf %51, %50 : vector<16x128xf32>
    %53 = arith.divf %51, %52 : vector<16x128xf32>
    %cst_16 = arith.constant 5.000000e-01 : f32
    %54 = vector.broadcast %cst_16 : f32 to vector<16x128xf32>
    %55 = arith.mulf %54, %26 : vector<16x128xf32>
    %56 = arith.addf %55, %35 : vector<16x128xf32>
    %cst_17 = arith.constant 5.000000e-01 : f32
    %57 = vector.broadcast %cst_17 : f32 to vector<16x128xf32>
    %58 = arith.mulf %57, %56 : vector<16x128xf32>
    %59 = arith.addf %58, %44 : vector<16x128xf32>
    %cst_18 = arith.constant 5.000000e-01 : f32
    %60 = vector.broadcast %cst_18 : f32 to vector<16x128xf32>
    %61 = arith.mulf %60, %59 : vector<16x128xf32>
    %62 = arith.addf %61, %53 : vector<16x128xf32>
    %63 = arith.subf %26, %26 : vector<16x128xf32>
    %64 = arith.subf %56, %35 : vector<16x128xf32>
    %65 = arith.subf %59, %44 : vector<16x128xf32>
    %66 = arith.subf %62, %53 : vector<16x128xf32>
    %cst_19 = arith.constant -1.000000e+00 : f32
    %67 = vector.broadcast %cst_19 : f32 to vector<16x128xf32>
    %68 = arith.mulf %67, %63 : vector<16x128xf32>
    %69 = arith.addf %68, %2 : vector<16x128xf32>
    %cst_20 = arith.constant -1.000000e+00 : f32
    %70 = vector.broadcast %cst_20 : f32 to vector<16x128xf32>
    %71 = arith.mulf %70, %64 : vector<16x128xf32>
    %72 = arith.addf %71, %11 : vector<16x128xf32>
    %cst_21 = arith.constant -1.000000e+00 : f32
    %73 = vector.broadcast %cst_21 : f32 to vector<16x128xf32>
    %74 = arith.mulf %73, %65 : vector<16x128xf32>
    %75 = arith.addf %74, %14 : vector<16x128xf32>
    %cst_22 = arith.constant -1.000000e+00 : f32
    %76 = vector.broadcast %cst_22 : f32 to vector<16x128xf32>
    %77 = arith.mulf %76, %66 : vector<16x128xf32>
    %78 = arith.addf %77, %17 : vector<16x128xf32>
    %cst_23 = arith.constant 1.000000e+00 : f32
    %79 = vector.broadcast %cst_23 : f32 to vector<16x128xf32>
    %80 = arith.subf %69, %79 : vector<16x128xf32>
    %cst_24 = arith.constant 6.000000e+00 : f32
    %81 = vector.broadcast %cst_24 : f32 to vector<16x128xf32>
    %82 = arith.mulf %80, %81 : vector<16x128xf32>
    %83 = arith.negf %82 : vector<16x128xf32>
    %84 = math.exp %83 : vector<16x128xf32>
    %cst_25 = arith.constant 1.000000e+00 : f32
    %85 = vector.broadcast %cst_25 : f32 to vector<16x128xf32>
    %86 = arith.addf %85, %84 : vector<16x128xf32>
    %87 = arith.divf %85, %86 : vector<16x128xf32>
    %cst_26 = arith.constant 1.000000e+00 : f32
    %88 = vector.broadcast %cst_26 : f32 to vector<16x128xf32>
    %89 = arith.subf %72, %88 : vector<16x128xf32>
    %cst_27 = arith.constant 6.000000e+00 : f32
    %90 = vector.broadcast %cst_27 : f32 to vector<16x128xf32>
    %91 = arith.mulf %89, %90 : vector<16x128xf32>
    %92 = arith.negf %91 : vector<16x128xf32>
    %93 = math.exp %92 : vector<16x128xf32>
    %cst_28 = arith.constant 1.000000e+00 : f32
    %94 = vector.broadcast %cst_28 : f32 to vector<16x128xf32>
    %95 = arith.addf %94, %93 : vector<16x128xf32>
    %96 = arith.divf %94, %95 : vector<16x128xf32>
    %cst_29 = arith.constant 1.000000e+00 : f32
    %97 = vector.broadcast %cst_29 : f32 to vector<16x128xf32>
    %98 = arith.subf %75, %97 : vector<16x128xf32>
    %cst_30 = arith.constant 6.000000e+00 : f32
    %99 = vector.broadcast %cst_30 : f32 to vector<16x128xf32>
    %100 = arith.mulf %98, %99 : vector<16x128xf32>
    %101 = arith.negf %100 : vector<16x128xf32>
    %102 = math.exp %101 : vector<16x128xf32>
    %cst_31 = arith.constant 1.000000e+00 : f32
    %103 = vector.broadcast %cst_31 : f32 to vector<16x128xf32>
    %104 = arith.addf %103, %102 : vector<16x128xf32>
    %105 = arith.divf %103, %104 : vector<16x128xf32>
    %cst_32 = arith.constant 1.000000e+00 : f32
    %106 = vector.broadcast %cst_32 : f32 to vector<16x128xf32>
    %107 = arith.subf %78, %106 : vector<16x128xf32>
    %cst_33 = arith.constant 6.000000e+00 : f32
    %108 = vector.broadcast %cst_33 : f32 to vector<16x128xf32>
    %109 = arith.mulf %107, %108 : vector<16x128xf32>
    %110 = arith.negf %109 : vector<16x128xf32>
    %111 = math.exp %110 : vector<16x128xf32>
    %cst_34 = arith.constant 1.000000e+00 : f32
    %112 = vector.broadcast %cst_34 : f32 to vector<16x128xf32>
    %113 = arith.addf %112, %111 : vector<16x128xf32>
    %114 = arith.divf %112, %113 : vector<16x128xf32>
    %cst_35 = arith.constant 5.000000e-01 : f32
    %115 = vector.broadcast %cst_35 : f32 to vector<16x128xf32>
    %116 = arith.mulf %115, %87 : vector<16x128xf32>
    %117 = arith.addf %116, %96 : vector<16x128xf32>
    %cst_36 = arith.constant 5.000000e-01 : f32
    %118 = vector.broadcast %cst_36 : f32 to vector<16x128xf32>
    %119 = arith.mulf %118, %117 : vector<16x128xf32>
    %120 = arith.addf %119, %105 : vector<16x128xf32>
    %cst_37 = arith.constant 5.000000e-01 : f32
    %121 = vector.broadcast %cst_37 : f32 to vector<16x128xf32>
    %122 = arith.mulf %121, %120 : vector<16x128xf32>
    %123 = arith.addf %122, %114 : vector<16x128xf32>
    %124 = arith.subf %87, %87 : vector<16x128xf32>
    %125 = arith.subf %117, %96 : vector<16x128xf32>
    %126 = arith.subf %120, %105 : vector<16x128xf32>
    %127 = arith.subf %123, %114 : vector<16x128xf32>
    %cst_38 = arith.constant -1.000000e+00 : f32
    %128 = vector.broadcast %cst_38 : f32 to vector<16x128xf32>
    %129 = arith.mulf %128, %124 : vector<16x128xf32>
    %130 = arith.addf %129, %2 : vector<16x128xf32>
    %cst_39 = arith.constant -1.000000e+00 : f32
    %131 = vector.broadcast %cst_39 : f32 to vector<16x128xf32>
    %132 = arith.mulf %131, %125 : vector<16x128xf32>
    %133 = arith.addf %132, %11 : vector<16x128xf32>
    %cst_40 = arith.constant -1.000000e+00 : f32
    %134 = vector.broadcast %cst_40 : f32 to vector<16x128xf32>
    %135 = arith.mulf %134, %126 : vector<16x128xf32>
    %136 = arith.addf %135, %14 : vector<16x128xf32>
    %cst_41 = arith.constant -1.000000e+00 : f32
    %137 = vector.broadcast %cst_41 : f32 to vector<16x128xf32>
    %138 = arith.mulf %137, %127 : vector<16x128xf32>
    %139 = arith.addf %138, %17 : vector<16x128xf32>
    %cst_42 = arith.constant 1.000000e+00 : f32
    %140 = vector.broadcast %cst_42 : f32 to vector<16x128xf32>
    %141 = arith.subf %130, %140 : vector<16x128xf32>
    %cst_43 = arith.constant 1.200000e+01 : f32
    %142 = vector.broadcast %cst_43 : f32 to vector<16x128xf32>
    %143 = arith.mulf %141, %142 : vector<16x128xf32>
    %144 = arith.negf %143 : vector<16x128xf32>
    %145 = math.exp %144 : vector<16x128xf32>
    %cst_44 = arith.constant 1.000000e+00 : f32
    %146 = vector.broadcast %cst_44 : f32 to vector<16x128xf32>
    %147 = arith.addf %146, %145 : vector<16x128xf32>
    %148 = arith.divf %146, %147 : vector<16x128xf32>
    %cst_45 = arith.constant 1.000000e+00 : f32
    %149 = vector.broadcast %cst_45 : f32 to vector<16x128xf32>
    %150 = arith.subf %133, %149 : vector<16x128xf32>
    %cst_46 = arith.constant 1.200000e+01 : f32
    %151 = vector.broadcast %cst_46 : f32 to vector<16x128xf32>
    %152 = arith.mulf %150, %151 : vector<16x128xf32>
    %153 = arith.negf %152 : vector<16x128xf32>
    %154 = math.exp %153 : vector<16x128xf32>
    %cst_47 = arith.constant 1.000000e+00 : f32
    %155 = vector.broadcast %cst_47 : f32 to vector<16x128xf32>
    %156 = arith.addf %155, %154 : vector<16x128xf32>
    %157 = arith.divf %155, %156 : vector<16x128xf32>
    %cst_48 = arith.constant 1.000000e+00 : f32
    %158 = vector.broadcast %cst_48 : f32 to vector<16x128xf32>
    %159 = arith.subf %136, %158 : vector<16x128xf32>
    %cst_49 = arith.constant 1.200000e+01 : f32
    %160 = vector.broadcast %cst_49 : f32 to vector<16x128xf32>
    %161 = arith.mulf %159, %160 : vector<16x128xf32>
    %162 = arith.negf %161 : vector<16x128xf32>
    %163 = math.exp %162 : vector<16x128xf32>
    %cst_50 = arith.constant 1.000000e+00 : f32
    %164 = vector.broadcast %cst_50 : f32 to vector<16x128xf32>
    %165 = arith.addf %164, %163 : vector<16x128xf32>
    %166 = arith.divf %164, %165 : vector<16x128xf32>
    %cst_51 = arith.constant 1.000000e+00 : f32
    %167 = vector.broadcast %cst_51 : f32 to vector<16x128xf32>
    %168 = arith.subf %139, %167 : vector<16x128xf32>
    %cst_52 = arith.constant 1.200000e+01 : f32
    %169 = vector.broadcast %cst_52 : f32 to vector<16x128xf32>
    %170 = arith.mulf %168, %169 : vector<16x128xf32>
    %171 = arith.negf %170 : vector<16x128xf32>
    %172 = math.exp %171 : vector<16x128xf32>
    %cst_53 = arith.constant 1.000000e+00 : f32
    %173 = vector.broadcast %cst_53 : f32 to vector<16x128xf32>
    %174 = arith.addf %173, %172 : vector<16x128xf32>
    %175 = arith.divf %173, %174 : vector<16x128xf32>
    %c0_54 = arith.constant 0 : index
    %c0_55 = arith.constant 0 : index
    %c0_56 = arith.constant 0 : index
    %176 = vector.load %arg2[%c0_54, %c0_55, %c0_56] : memref<4x16x128xf32, #tpu.memory_space<vmem>>, vector<4x16x128xf32>
    %177 = vector.extract_strided_slice %176 {offsets = [0, 0, 0], sizes = [1, 16, 128], strides = [1, 1, 1]} : vector<4x16x128xf32> to vector<1x16x128xf32>
    %178 = vector.shape_cast %177 : vector<1x16x128xf32> to vector<16x128xf32>
    %179 = arith.cmpf olt, %178, %148 : vector<16x128xf32>
    %180 = arith.extui %179 : vector<16x128xi1> to vector<16x128xi32>
    %181 = arith.sitofp %180 : vector<16x128xi32> to vector<16x128xf32>
    %c0_57 = arith.constant 0 : index
    %c0_58 = arith.constant 0 : index
    %c0_59 = arith.constant 0 : index
    %182 = vector.load %arg3[%c0_57, %c0_58, %c0_59] : memref<4x16x128xf32, #tpu.memory_space<vmem>>, vector<1x16x128xf32>
    %183 = vector.shape_cast %182 : vector<1x16x128xf32> to vector<16x128xf32>
    %184 = vector.shape_cast %181 : vector<16x128xf32> to vector<1x16x128xf32>
    tpu.vector_store %arg3[%c0_57, %c0_58, %c0_59], %184 {strides = array<i32>} : memref<4x16x128xf32, #tpu.memory_space<vmem>>, vector<1x16x128xf32>,
    %185 = vector.extract_strided_slice %176 {offsets = [1, 0, 0], sizes = [1, 16, 128], strides = [1, 1, 1]} : vector<4x16x128xf32> to vector<1x16x128xf32>
    %186 = vector.shape_cast %185 : vector<1x16x128xf32> to vector<16x128xf32>
    %187 = arith.cmpf olt, %186, %157 : vector<16x128xf32>
    %188 = arith.extui %187 : vector<16x128xi1> to vector<16x128xi32>
    %189 = arith.sitofp %188 : vector<16x128xi32> to vector<16x128xf32>
    %c1 = arith.constant 1 : index
    %c0_60 = arith.constant 0 : index
    %c0_61 = arith.constant 0 : index
    %190 = vector.load %arg3[%c1, %c0_60, %c0_61] : memref<4x16x128xf32, #tpu.memory_space<vmem>>, vector<1x16x128xf32>
    %191 = vector.shape_cast %190 : vector<1x16x128xf32> to vector<16x128xf32>
    %192 = vector.shape_cast %189 : vector<16x128xf32> to vector<1x16x128xf32>
    tpu.vector_store %arg3[%c1, %c0_60, %c0_61], %192 {strides = array<i32>} : memref<4x16x128xf32, #tpu.memory_space<vmem>>, vector<1x16x128xf32>,
    %193 = vector.extract_strided_slice %176 {offsets = [2, 0, 0], sizes = [1, 16, 128], strides = [1, 1, 1]} : vector<4x16x128xf32> to vector<1x16x128xf32>
    %194 = vector.shape_cast %193 : vector<1x16x128xf32> to vector<16x128xf32>
    %195 = arith.cmpf olt, %194, %166 : vector<16x128xf32>
    %196 = arith.extui %195 : vector<16x128xi1> to vector<16x128xi32>
    %197 = arith.sitofp %196 : vector<16x128xi32> to vector<16x128xf32>
    %c2 = arith.constant 2 : index
    %c0_62 = arith.constant 0 : index
    %c0_63 = arith.constant 0 : index
    %198 = vector.load %arg3[%c2, %c0_62, %c0_63] : memref<4x16x128xf32, #tpu.memory_space<vmem>>, vector<1x16x128xf32>
    %199 = vector.shape_cast %198 : vector<1x16x128xf32> to vector<16x128xf32>
    %200 = vector.shape_cast %197 : vector<16x128xf32> to vector<1x16x128xf32>
    tpu.vector_store %arg3[%c2, %c0_62, %c0_63], %200 {strides = array<i32>} : memref<4x16x128xf32, #tpu.memory_space<vmem>>, vector<1x16x128xf32>,
    %201 = vector.extract_strided_slice %176 {offsets = [3, 0, 0], sizes = [1, 16, 128], strides = [1, 1, 1]} : vector<4x16x128xf32> to vector<1x16x128xf32>
    %202 = vector.shape_cast %201 : vector<1x16x128xf32> to vector<16x128xf32>
    %203 = arith.cmpf olt, %202, %175 : vector<16x128xf32>
    %204 = arith.extui %203 : vector<16x128xi1> to vector<16x128xi32>
    %205 = arith.sitofp %204 : vector<16x128xi32> to vector<16x128xf32>
    %c3 = arith.constant 3 : index
    %c0_64 = arith.constant 0 : index
    %c0_65 = arith.constant 0 : index
    %206 = vector.load %arg3[%c3, %c0_64, %c0_65] : memref<4x16x128xf32, #tpu.memory_space<vmem>>, vector<1x16x128xf32>
    %207 = vector.shape_cast %206 : vector<1x16x128xf32> to vector<16x128xf32>
    %208 = vector.shape_cast %205 : vector<16x128xf32> to vector<1x16x128xf32>
    tpu.vector_store %arg3[%c3, %c0_64, %c0_65], %208 {strides = array<i32>} : memref<4x16x128xf32, #tpu.memory_space<vmem>>, vector<1x16x128xf32>,
    return
  }
  func.func @transform_0(%arg0: i32) -> (i32, i32, i32) {
    %c0_i32 = arith.constant 0 : i32
    %c0_i32_0 = arith.constant 0 : i32
    %c0_i32_1 = arith.constant 0 : i32
    return %c0_i32, %arg0, %c0_i32_0 : i32, i32, i32
  }
  func.func @transform_1(%arg0: i32) -> (i32, i32, i32) {
    %c0_i32 = arith.constant 0 : i32
    %c0_i32_0 = arith.constant 0 : i32
    %c0_i32_1 = arith.constant 0 : i32
    return %c0_i32, %arg0, %c0_i32_0 : i32, i32, i32
  }
  func.func @transform_2(%arg0: i32) -> (i32, i32, i32) {
    %c0_i32 = arith.constant 0 : i32
    %c0_i32_0 = arith.constant 0 : i32
    %c0_i32_1 = arith.constant 0 : i32
    return %c0_i32, %arg0, %c0_i32_0 : i32, i32, i32
  }
}

</mosaic_0001>

<llo_original>
// kernel: tpu_custom_call.1
$region0: #{tpu_custom_call.1}
  #allocation0 [shape = 'u32[]', space=smem, size = 0x4, offset = 0x4, fixed_abs, tag = 'smem constant byte address 0x4 - core index']
  #allocation1 [shape = 'u32[144,128]{1,0:T(1,128)}', space=vmem, size = 0x12000, scoped, tag = 'internal scratch']
  %s0 = inlined_call_operand.hbm [shape: f32[4,16,128], index: 0, kind: input, shape index: {}]
  %s1 = inlined_call_operand.hbm [shape: f32[4,16,128], index: 1, kind: input, shape index: {}]
  %s2 = inlined_call_operand.hbm [shape: f32[4,16,128], index: 2, kind: output, shape index: {}]
  %s3 = sld [smem:[#allocation0]]
  $region26: #{tpu_custom_call.1} parent=0
    _
  %s5 = ssub.s32 1, %s3
  %s6 = scalar_select 0, %s5, %s3
  $region1: #{tpu_custom_call.1} parent=0
    #allocation2 [shape = 'u8[32768]{0}', space=vmem, size = 0x8000, scoped, tag = 'input window, operand 0, single buffered']
    #allocation3 [shape = 's32[1]{0}', space=sflag, size = 0x4, scoped, tag = 'scoped memory for tpu_custom_call.1']
    #allocation4 [shape = 's32[1]{0}', space=sflag, size = 0x4, scoped, tag = 'scoped memory for tpu_custom_call.1']
    #allocation5 [shape = 'u8[32768]{0}', space=vmem, size = 0x8000, scoped, tag = 'input window, operand 1, single buffered']
    #allocation6 [shape = 's32[1]{0}', space=sflag, size = 0x4, scoped, tag = 'scoped memory for tpu_custom_call.1']
    #allocation7 [shape = 'u8[32768]{0}', space=vmem, size = 0x8000, scoped, tag = 'output window, operand 0, single buffered']
    %7 = vsyncpa [#allocation3], 0
    %8 = vsyncpa [#allocation6], 0
    %9 = vsyncpa [#allocation4], 0
    // Predicated region
    $region2: #{tpu_custom_call.1} parent=1 // pred_check
      _
    $region3: #{tpu_custom_call.1} parent=1 // pred_check_branch
      %11 = sbr.rel (0) target = $region5
    $region4: #{tpu_custom_call.1} parent=1 // pred_region
      %s13 = ssub.s32 1024, 1024
      %14 = vsyncadd [#allocation3], %s13
      %s15 = sshll.u32 [#allocation2], 4
      %s16 = int_to_ptr.vmem [resolvable:$true] %s15
      %21 = dma.hbm_to_vmem [thread:$0]  %s0, 1024, %s16, [#allocation3], 128, 128, 8
    $region5: #{tpu_custom_call.1} parent=1 // pred_fallthru
      _
    // Predicated region
    $region6: #{tpu_custom_call.1} parent=1 // pred_check
      _
    $region7: #{tpu_custom_call.1} parent=1 // pred_check_branch
      %23 = sbr.rel (0) target = $region9
    $region8: #{tpu_custom_call.1} parent=1 // pred_region
      %s25 = ssub.s32 1024, 1024
      %26 = vsyncadd [#allocation6], %s25
      %s27 = sshll.u32 [#allocation5], 4
      %s28 = int_to_ptr.vmem [resolvable:$true] %s27
      %33 = dma.hbm_to_vmem [thread:$0]  %s1, 1024, %s28, [#allocation6], 128, 128, 8
    $region9: #{tpu_custom_call.1} parent=1 // pred_fallthru
      _
    // Predicated region
    $region10: #{tpu_custom_call.1} parent=1 // pred_check
      _
    $region11: #{tpu_custom_call.1} parent=1 // pred_check_branch
      %35 = sbr.rel (0) target = $region13
    $region12: #{tpu_custom_call.1} parent=1 // pred_region
      %36 = dma.done [#allocation3], 1024
    $region13: #{tpu_custom_call.1} parent=1 // pred_fallthru
      _
    // Predicated region
    $region14: #{tpu_custom_call.1} parent=1 // pred_check
      _
    $region15: #{tpu_custom_call.1} parent=1 // pred_check_branch
      %38 = sbr.rel (0) target = $region17
    $region16: #{tpu_custom_call.1} parent=1 // pred_region
      %39 = dma.done [#allocation6], 1024
    $region17: #{tpu_custom_call.1} parent=1 // pred_fallthru
      _
    %v40 = vld [vmem:[#allocation2] sm:$0xff]
    %v41 = vld [vmem:[#allocation2 + $0x8] sm:$0xff]
    %v42 = vld [vmem:[#allocation2 + $0x10] sm:$0xff]
    %v43 = vld [vmem:[#allocation2 + $0x18] sm:$0xff]
    %v44 = vld [vmem:[#allocation2 + $0x20] sm:$0xff]
    %v45 = vld [vmem:[#allocation2 + $0x28] sm:$0xff]
    %v46 = vld [vmem:[#allocation2 + $0x30] sm:$0xff]
    %v47 = vld [vmem:[#allocation2 + $0x38] sm:$0xff]
    %v48 = vmul.f32 %v40, 0.5
    %v49 = vmul.f32 %v41, 0.5
    %v50 = vadd.f32 %v48, %v42
    %v51 = vadd.f32 %v49, %v43
    %v52 = vmul.f32 %v50, 0.5
    %v53 = vmul.f32 %v51, 0.5
    %v54 = vadd.f32 %v52, %v44
    %v55 = vadd.f32 %v53, %v45
    %v56 = vmul.f32 %v54, 0.5
    %v57 = vmul.f32 %v55, 0.5
    %v58 = vadd.f32 %v56, %v46
    %v59 = vadd.f32 %v57, %v47
    %v60 = vsub.f32 %v40, 1.0
    %v61 = vsub.f32 %v41, 1.0
    %v62 = vmul.f32 %v60, 2.0
    %v63 = vmul.f32 %v61, 2.0
    %v64 = vxor.u32 %v62, 2147483648
    %v65 = vxor.u32 %v63, 2147483648
    %v66 = vmul.f32 %v64, 1.442695
    %v67 = vpow.pop %v66
    %v68 = vmul.f32 %v65, 1.442695
    %v69 = vpow.pop %v68
    %v70 = vadd.f32 %v67, 1.0
    %v71 = vadd.f32 %v69, 1.0
    %v72 = vrcp.pop %v70
    %v73 = vmul.f32 1.0, %v72
    %v74 = vrcp.pop %v71
    %v75 = vmul.f32 1.0, %v74
    %v76 = vsub.f32 %v50, 1.0
    %v77 = vsub.f32 %v51, 1.0
    %v78 = vmul.f32 %v76, 2.0
    %v79 = vmul.f32 %v77, 2.0
    %v80 = vxor.u32 %v78, 2147483648
    %v81 = vxor.u32 %v79, 2147483648
    %v82 = vmul.f32 %v80, 1.442695
    %v83 = vpow.pop %v82
    %v84 = vmul.f32 %v81, 1.442695
    %v85 = vpow.pop %v84
    %v86 = vadd.f32 %v83, 1.0
    %v87 = vadd.f32 %v85, 1.0
    %v88 = vrcp.pop %v86
    %v89 = vmul.f32 1.0, %v88
    %v90 = vrcp.pop %v87
    %v91 = vmul.f32 1.0, %v90
    %v92 = vsub.f32 %v54, 1.0
    %v93 = vsub.f32 %v55, 1.0
    %v94 = vmul.f32 %v92, 2.0
    %v95 = vmul.f32 %v93, 2.0
    %v96 = vxor.u32 %v94, 2147483648
    %v97 = vxor.u32 %v95, 2147483648
    %v98 = vmul.f32 %v96, 1.442695
    %v99 = vpow.pop %v98
    %v100 = vmul.f32 %v97, 1.442695
    %v101 = vpow.pop %v100
    %v102 = vadd.f32 %v99, 1.0
    %v103 = vadd.f32 %v101, 1.0
    %v104 = vrcp.pop %v102
    %v105 = vmul.f32 1.0, %v104
    %v106 = vrcp.pop %v103
    %v107 = vmul.f32 1.0, %v106
    %v108 = vsub.f32 %v58, 1.0
    %v109 = vsub.f32 %v59, 1.0
    %v110 = vmul.f32 %v108, 2.0
    %v111 = vmul.f32 %v109, 2.0
    %v112 = vxor.u32 %v110, 2147483648
    %v113 = vxor.u32 %v111, 2147483648
    %v114 = vmul.f32 %v112, 1.442695
    %v115 = vpow.pop %v114
    %v116 = vmul.f32 %v113, 1.442695
    %v117 = vpow.pop %v116
    %v118 = vadd.f32 %v115, 1.0
    %v119 = vadd.f32 %v117, 1.0
    %v120 = vrcp.pop %v118
    %v121 = vmul.f32 1.0, %v120
    %v122 = vrcp.pop %v119
    %v123 = vmul.f32 1.0, %v122
    %v124 = vmul.f32 %v73, 0.5
    %v125 = vmul.f32 %v75, 0.5
    %v126 = vadd.f32 %v124, %v89
    %v127 = vadd.f32 %v125, %v91
    %v128 = vmul.f32 %v126, 0.5
    %v129 = vmul.f32 %v127, 0.5
    %v130 = vadd.f32 %v128, %v105
    %v131 = vadd.f32 %v129, %v107
    %v132 = vmul.f32 %v130, 0.5
    %v133 = vmul.f32 %v131, 0.5
    %v134 = vadd.f32 %v132, %v121
    %v135 = vadd.f32 %v133, %v123
    %v136 = vsub.f32 %v73, %v73
    %v137 = vsub.f32 %v75, %v75
    %v138 = vsub.f32 %v126, %v89
    %v139 = vsub.f32 %v127, %v91
    %v140 = vsub.f32 %v130, %v105
    %v141 = vsub.f32 %v131, %v107
    %v142 = vsub.f32 %v134, %v121
    %v143 = vsub.f32 %v135, %v123
    %v144 = vmul.f32 %v136, -1.0
    %v145 = vmul.f32 %v137, -1.0
    %v146 = vadd.f32 %v144, %v40
    %v147 = vadd.f32 %v145, %v41
    %v148 = vmul.f32 %v138, -1.0
    %v149 = vmul.f32 %v139, -1.0
    %v150 = vadd.f32 %v148, %v50
    %v151 = vadd.f32 %v149, %v51
    %v152 = vmul.f32 %v140, -1.0
    %v153 = vmul.f32 %v141, -1.0
    %v154 = vadd.f32 %v152, %v54
    %v155 = vadd.f32 %v153, %v55
    %v156 = vmul.f32 %v142, -1.0
    %v157 = vmul.f32 %v143, -1.0
    %v158 = vadd.f32 %v156, %v58
    %v159 = vadd.f32 %v157, %v59
    %v160 = vsub.f32 %v146, 1.0
    %v161 = vsub.f32 %v147, 1.0
    %v162 = vmul.f32 %v160, 6.0
    %v163 = vmul.f32 %v161, 6.0
    %v164 = vxor.u32 %v162, 2147483648
    %v165 = vxor.u32 %v163, 2147483648
    %v166 = vmul.f32 %v164, 1.442695
    %v167 = vpow.pop %v166
    %v168 = vmul.f32 %v165, 1.442695
    %v169 = vpow.pop %v168
    %v170 = vadd.f32 %v167, 1.0
    %v171 = vadd.f32 %v169, 1.0
    %v172 = vrcp.pop %v170
    %v173 = vmul.f32 1.0, %v172
    %v174 = vrcp.pop %v171
    %v175 = vmul.f32 1.0, %v174
    %v176 = vsub.f32 %v150, 1.0
    %v177 = vsub.f32 %v151, 1.0
    %v178 = vmul.f32 %v176, 6.0
    %v179 = vmul.f32 %v177, 6.0
    %v180 = vxor.u32 %v178, 2147483648
    %v181 = vxor.u32 %v179, 2147483648
    %v182 = vmul.f32 %v180, 1.442695
    %v183 = vpow.pop %v182
    %v184 = vmul.f32 %v181, 1.442695
    %v185 = vpow.pop %v184
    %v186 = vadd.f32 %v183, 1.0
    %v187 = vadd.f32 %v185, 1.0
    %v188 = vrcp.pop %v186
    %v189 = vmul.f32 1.0, %v188
    %v190 = vrcp.pop %v187
    %v191 = vmul.f32 1.0, %v190
    %v192 = vsub.f32 %v154, 1.0
    %v193 = vsub.f32 %v155, 1.0
    %v194 = vmul.f32 %v192, 6.0
    %v195 = vmul.f32 %v193, 6.0
    %v196 = vxor.u32 %v194, 2147483648
    %v197 = vxor.u32 %v195, 2147483648
    %v198 = vmul.f32 %v196, 1.442695
    %v199 = vpow.pop %v198
    %v200 = vmul.f32 %v197, 1.442695
    %v201 = vpow.pop %v200
    %v202 = vadd.f32 %v199, 1.0
    %v203 = vadd.f32 %v201, 1.0
    %v204 = vrcp.pop %v202
    %v205 = vmul.f32 1.0, %v204
    %v206 = vrcp.pop %v203
    %v207 = vmul.f32 1.0, %v206
    %v208 = vsub.f32 %v158, 1.0
    %v209 = vsub.f32 %v159, 1.0
    %v210 = vmul.f32 %v208, 6.0
    %v211 = vmul.f32 %v209, 6.0
    %v212 = vxor.u32 %v210, 2147483648
    %v213 = vxor.u32 %v211, 2147483648
    %v214 = vmul.f32 %v212, 1.442695
    %v215 = vpow.pop %v214
    %v216 = vmul.f32 %v213, 1.442695
    %v217 = vpow.pop %v216
    %v218 = vadd.f32 %v215, 1.0
    %v219 = vadd.f32 %v217, 1.0
    %v220 = vrcp.pop %v218
    %v221 = vmul.f32 1.0, %v220
    %v222 = vrcp.pop %v219
    %v223 = vmul.f32 1.0, %v222
    %v224 = vmul.f32 %v173, 0.5
    %v225 = vmul.f32 %v175, 0.5
    %v226 = vadd.f32 %v224, %v189
    %v227 = vadd.f32 %v225, %v191
    %v228 = vmul.f32 %v226, 0.5
    %v229 = vmul.f32 %v227, 0.5
    %v230 = vadd.f32 %v228, %v205
    %v231 = vadd.f32 %v229, %v207
    %v232 = vmul.f32 %v230, 0.5
    %v233 = vmul.f32 %v231, 0.5
    %v234 = vadd.f32 %v232, %v221
    %v235 = vadd.f32 %v233, %v223
    %v236 = vsub.f32 %v173, %v173
    %v237 = vsub.f32 %v175, %v175
    %v238 = vsub.f32 %v226, %v189
    %v239 = vsub.f32 %v227, %v191
    %v240 = vsub.f32 %v230, %v205
    %v241 = vsub.f32 %v231, %v207
    %v242 = vsub.f32 %v234, %v221
    %v243 = vsub.f32 %v235, %v223
    %v244 = vmul.f32 %v236, -1.0
    %v245 = vmul.f32 %v237, -1.0
    %v246 = vadd.f32 %v244, %v40
    %v247 = vadd.f32 %v245, %v41
    %v248 = vmul.f32 %v238, -1.0
    %v249 = vmul.f32 %v239, -1.0
    %v250 = vadd.f32 %v248, %v50
    %v251 = vadd.f32 %v249, %v51
    %v252 = vmul.f32 %v240, -1.0
    %v253 = vmul.f32 %v241, -1.0
    %v254 = vadd.f32 %v252, %v54
    %v255 = vadd.f32 %v253, %v55
    %v256 = vmul.f32 %v242, -1.0
    %v257 = vmul.f32 %v243, -1.0
    %v258 = vadd.f32 %v256, %v58
    %v259 = vadd.f32 %v257, %v59
    %v260 = vsub.f32 %v246, 1.0
    %v261 = vsub.f32 %v247, 1.0
    %v262 = vmul.f32 %v260, 12.0
    %v263 = vmul.f32 %v261, 12.0
    %v264 = vxor.u32 %v262, 2147483648
    %v265 = vxor.u32 %v263, 2147483648
    %v266 = vmul.f32 %v264, 1.442695
    %v267 = vpow.pop %v266
    %v268 = vmul.f32 %v265, 1.442695
    %v269 = vpow.pop %v268
    %v270 = vadd.f32 %v267, 1.0
    %v271 = vadd.f32 %v269, 1.0
    %v272 = vrcp.pop %v270
    %v273 = vmul.f32 1.0, %v272
    %v274 = vrcp.pop %v271
    %v275 = vmul.f32 1.0, %v274
    %v276 = vsub.f32 %v250, 1.0
    %v277 = vsub.f32 %v251, 1.0
    %v278 = vmul.f32 %v276, 12.0
    %v279 = vmul.f32 %v277, 12.0
    %v280 = vxor.u32 %v278, 2147483648
    %v281 = vxor.u32 %v279, 2147483648
    %v282 = vmul.f32 %v280, 1.442695
    %v283 = vpow.pop %v282
    %v284 = vmul.f32 %v281, 1.442695
    %v285 = vpow.pop %v284
    %v286 = vadd.f32 %v283, 1.0
    %v287 = vadd.f32 %v285, 1.0
    %v288 = vrcp.pop %v286
    %v289 = vmul.f32 1.0, %v288
    %v290 = vrcp.pop %v287
    %v291 = vmul.f32 1.0, %v290
    %v292 = vsub.f32 %v254, 1.0
    %v293 = vsub.f32 %v255, 1.0
    %v294 = vmul.f32 %v292, 12.0
    %v295 = vmul.f32 %v293, 12.0
    %v296 = vxor.u32 %v294, 2147483648
    %v297 = vxor.u32 %v295, 2147483648
    %v298 = vmul.f32 %v296, 1.442695
    %v299 = vpow.pop %v298
    %v300 = vmul.f32 %v297, 1.442695
    %v301 = vpow.pop %v300
    %v302 = vadd.f32 %v299, 1.0
    %v303 = vadd.f32 %v301, 1.0
    %v304 = vrcp.pop %v302
    %v305 = vmul.f32 1.0, %v304
    %v306 = vrcp.pop %v303
    %v307 = vmul.f32 1.0, %v306
    %v308 = vsub.f32 %v258, 1.0
    %v309 = vsub.f32 %v259, 1.0
    %v310 = vmul.f32 %v308, 12.0
    %v311 = vmul.f32 %v309, 12.0
    %v312 = vxor.u32 %v310, 2147483648
    %v313 = vxor.u32 %v311, 2147483648
    %v314 = vmul.f32 %v312, 1.442695
    %v315 = vpow.pop %v314
    %v316 = vmul.f32 %v313, 1.442695
    %v317 = vpow.pop %v316
    %v318 = vadd.f32 %v315, 1.0
    %v319 = vadd.f32 %v317, 1.0
    %v320 = vrcp.pop %v318
    %v321 = vmul.f32 1.0, %v320
    %v322 = vrcp.pop %v319
    %v323 = vmul.f32 1.0, %v322
    %v324 = vld [vmem:[#allocation5] sm:$0xff]
    %v325 = vld [vmem:[#allocation5 + $0x8] sm:$0xff]
    %v326 = vld [vmem:[#allocation5 + $0x10] sm:$0xff]
    %v327 = vld [vmem:[#allocation5 + $0x18] sm:$0xff]
    %v328 = vld [vmem:[#allocation5 + $0x20] sm:$0xff]
    %v329 = vld [vmem:[#allocation5 + $0x28] sm:$0xff]
    %v330 = vld [vmem:[#allocation5 + $0x30] sm:$0xff]
    %v331 = vld [vmem:[#allocation5 + $0x38] sm:$0xff]
    %vm332 = vcmp.lt.f32.partialorder %v324, %v273
    %vm333 = vcmp.lt.f32.partialorder %v325, %v275
    %v334 = vsel %vm332, 1, 0
    %v335 = vsel %vm333, 1, 0
    %v336 = vcvt.s32.f32 %v334
    %v337 = vcvt.s32.f32 %v335
    %338 = vst [vmem:[#allocation7] sm:$0xff] %v336
    %339 = vst [vmem:[#allocation7 + $0x8] sm:$0xff] %v337
    %vm340 = vcmp.lt.f32.partialorder %v326, %v289
    %vm341 = vcmp.lt.f32.partialorder %v327, %v291
    %v342 = vsel %vm340, 1, 0
    %v343 = vsel %vm341, 1, 0
    %v344 = vcvt.s32.f32 %v342
    %v345 = vcvt.s32.f32 %v343
    %s346 = scalar_lea.vmem [#allocation7], 16
    %347 = vst [vmem:[%s346] sm:$0xff] %v344
    %348 = vst [vmem:[%s346 + $0x8] sm:$0xff] %v345
    %vm349 = vcmp.lt.f32.partialorder %v328, %v305
    %vm350 = vcmp.lt.f32.partialorder %v329, %v307
    %v351 = vsel %vm349, 1, 0
    %v352 = vsel %vm350, 1, 0
    %v353 = vcvt.s32.f32 %v351
    %v354 = vcvt.s32.f32 %v352
    %s355 = scalar_lea.vmem [#allocation7], 32
    %356 = vst [vmem:[%s355] sm:$0xff] %v353
    %357 = vst [vmem:[%s355 + $0x8] sm:$0xff] %v354
    %vm358 = vcmp.lt.f32.partialorder %v330, %v321
    %vm359 = vcmp.lt.f32.partialorder %v331, %v323
    %v360 = vsel %vm358, 1, 0
    %v361 = vsel %vm359, 1, 0
    %v362 = vcvt.s32.f32 %v360
    %v363 = vcvt.s32.f32 %v361
    %s364 = scalar_lea.vmem [#allocation7], 48
    %365 = vst [vmem:[%s364] sm:$0xff] %v362
    %366 = vst [vmem:[%s364 + $0x8] sm:$0xff] %v363
    // Predicated region
    $region18: #{tpu_custom_call.1} parent=1 // pred_check
      _
    $region19: #{tpu_custom_call.1} parent=1 // pred_check_branch
      %368 = sbr.rel (0) target = $region21
    $region20: #{tpu_custom_call.1} parent=1 // pred_region
      %s370 = ssub.s32 1024, 1024
      %371 = vsyncadd [#allocation4], %s370
      %s372 = sshll.u32 [#allocation7], 4
      %s373 = int_to_ptr.vmem [resolvable:$true] %s372
      %378 = dma.vmem_to_hbm [thread:$0]  %s373, 1024, %s2, [#allocation4], 128, 128, 8
    $region21: #{tpu_custom_call.1} parent=1 // pred_fallthru
      _
    // Predicated region
    $region22: #{tpu_custom_call.1} parent=1 // pred_check
      _
    $region23: #{tpu_custom_call.1} parent=1 // pred_check_branch
      %380 = sbr.rel (0) target = $region25
    $region24: #{tpu_custom_call.1} parent=1 // pred_region
      %381 = dma.done [#allocation4], 1024
    $region25: #{tpu_custom_call.1} parent=1 // pred_fallthru
      _
    %382 = vsyncpa [#allocation3], 1
    %383 = vsyncpa [#allocation6], 1
    %384 = vsyncpa [#allocation4], 1

</llo_original>
